<compile_context>
chip_gen: v6e
topology: v6e:2x2x1
jax: 0.10.0
libtpu: 0.0.40
codegen_flags: <defaults>
</compile_context>

<pallas_src>
import math
from functools import partial

import numpy as np
import jax
import jax.numpy as jnp
from jax import lax
from jax.experimental import pallas as pl
from jax.experimental.pallas import tpu as pltpu

# ---------------------------- module configuration (small) ---------------------------
EMBED_DIM = 32                    # embed_dim
NUM_HEADS = 4                     # head_dim = 8 (divisible by 8, <= 128, as required)
HEAD_DIM = EMBED_DIM // NUM_HEADS
SEGMENT_LENGTHS = (4, 8)
DILATION_RATES = (1, 2)
BATCH = 2
SEQ = 8                           # divisible by every segment length
LN_EPS = 1e-5
GAMMA_INIT = 1.0
LANES = 128                       # lane width used for padded output / packed params

VMEM = pl.BlockSpec(memory_space=pltpu.MemorySpace.VMEM)


def _group_schedule(num_heads, dilation_rates, segment_lengths):
    """Static per-group metadata, mirroring DilatedAttention.forward exactly."""
    num_groups = len(dilation_rates)
    group_sizes = [num_heads // num_groups] * num_groups
    for i in range(num_heads % num_groups):
        group_sizes[i] += 1
    sched = []
    for i, (g, r, s) in enumerate(zip(group_sizes, dilation_rates, segment_lengths)):
        sched.append(dict(g=g, r=r, s=s, offset=i % r,
                          hmin=i * g, hmax=min((i + 1) * g, num_heads)))
    return num_groups, sched


def _pack_geometry(B, S, D, DH, num_groups, schedule):
    """Pack every static 0/1 matrix the kernel needs into ONE (rows, 128) f32 array.

    Built with numpy at trace time -> a jit constant, costing a single DMA.
    """
    M = B * S
    Mp = ((M + 7) // 8) * 8
    scale = 1.0 / math.sqrt(DH)
    d = np.arange(D)
    # per-head-block sum-and-broadcast matrix; softmax scale folded in
    hsum = (d[:, None] // DH == d[None, :] // DH).astype(np.float32) * scale
    # pair-swap permutation: head h <-> h ^ 1 (group i owns heads (2i, 2i+1))
    pswp = np.zeros((D, D), np.float32)
    pswp[d, ((d // DH) ^ 1) * DH + (d % DH)] = 1.0
    # same-batch row-sum matrix; the reference's final `out / num_groups` folded in
    mi = np.arange(M)
    bsum = (mi[:, None] // S == mi[None, :] // S).astype(np.float32) * num_groups
    # dilation mask: row m keeps group gi's columns iff its in-segment position
    # matches offset (mod r) for that group
    sel = np.zeros((M, D), np.float32)
    t = mi % S
    for grp in schedule:
        keep = (((t % grp["s"]) % grp["r"]) == grp["offset"]).astype(np.float32)
        sel[:, grp["hmin"] * DH:grp["hmax"] * DH] = keep[:, None]

    def pad(a, rows):
        out = np.zeros((rows, LANES), np.float32)
        out[:a.shape[0], :a.shape[1]] = a
        return out

    geo = np.concatenate([pad(hsum, D), pad(pswp, D), pad(bsum, Mp), pad(sel, Mp)], 0)
    offs = dict(r_hsum=0, r_pswp=D, r_bsum=2 * D, r_sel=2 * D + Mp)
    return jnp.asarray(geo), offs


# ===================================== kernel ========================================
def _mhda_kernel(xs_ref, wqkv_ref, wo_ref, par_ref, geo_ref, o_ref, *,
                 M, D, r_hsum, r_pswp, r_bsum, r_sel, use_ln, eps):
    f32 = jnp.float32

    # --- packed small params (one array, tiny VMEM reads, no extra DMA descriptors) -
    b_q = par_ref[0:1, 0:D]
    b_k = par_ref[1:2, 0:D]
    b_v = par_ref[2:3, 0:D]
    ln_g = par_ref[3:4, 0:D]
    ln_b = par_ref[4:5, 0:D]
    b_o = par_ref[5:6, :]                           # (1, 128) padded out-proj bias

    # --- packed static geometry ------------------------------------------------------
    hsum = geo_ref[r_hsum:r_hsum + D, 0:D]          # block head-sum * softmax scale
    pswp = geo_ref[r_pswp:r_pswp + D, 0:D]          # head pair-swap permutation
    bsum = geo_ref[r_bsum:r_bsum + M, 0:M]          # same-batch sum * num_groups
    sel = geo_ref[r_sel:r_sel + M, 0:D]             # dilation row/column mask

    # --- Q/K/V projections: bf16 MXU matmuls, f32 accumulation -----------------------
    q = jnp.dot(xs_ref[0], wqkv_ref[0], preferred_element_type=f32) + b_q   # (M, D)
    k = jnp.dot(xs_ref[1], wqkv_ref[1], preferred_element_type=f32) + b_k
    v = jnp.dot(xs_ref[2], wqkv_ref[2], preferred_element_type=f32) + b_v

    # --- attention across the 2 heads of each group, all (row, head) pairs at once ---
    pk = jnp.dot(k, pswp, preferred_element_type=f32)       # partner head's key
    pv = jnp.dot(v, pswp, preferred_element_type=f32)       # partner head's value
    s_self = jnp.dot(q * k, hsum, preferred_element_type=f32)    # score, bcast / block
    s_cross = jnp.dot(q * pk, hsum, preferred_element_type=f32)
    mx = jnp.maximum(s_self, s_cross)
    e_self = jnp.exp(s_self - mx)
    e_cross = jnp.exp(s_cross - mx)
    inv_den = pl.reciprocal(e_self + e_cross, approx=True)   # EUP slot
    x = (e_self * v + e_cross * pv) * inv_den                # (M, D)

    # --- dilation + LongNet per-group normalisation (out/num_groups folded in bsum) --
    # Masked rows are exactly zero, so the same-batch column sums equal the
    # reference's sum over the selected (dilated) positions only.  NOTE: like the
    # reference, the divide has no epsilon guard (raw attention-output sums).
    x = x * sel
    denom = jnp.dot(bsum, x, preferred_element_type=f32)     # per-batch column sums
    x = x * pl.reciprocal(denom, approx=True)

    if use_ln:                                                # fused LayerNorm
        mu = jnp.mean(x, axis=-1, keepdims=True)
        cx = x - mu
        var = jnp.mean(cx * cx, axis=-1, keepdims=True)
        x = cx * lax.rsqrt(var + eps) * ln_g + ln_b

    # --- out-projection into 128 padded lanes -> unmasked lane-dense store -----------
    o_ref[...] = jnp.dot(x.astype(jnp.bfloat16), wo_ref[...],
                         preferred_element_type=f32) + b_o


# ===================================== wrapper =======================================
def multihead_dilated_attention(query, key, value, params, *,
                                num_heads=NUM_HEADS,
                                dilation_rates=DILATION_RATES,
                                segment_lengths=SEGMENT_LENGTHS,
                                layer_norm=True,
                                layer_norm_eps=LN_EPS):
    """Forward pass of MultiheadDilatedAttention (dropout=0; is_causal unused by ref)."""
    B, S, D = query.shape
    DH = D // num_heads
    M = B * S
    num_groups, schedule = _group_schedule(num_heads, dilation_rates, segment_lengths)

    assert D % num_heads == 0 and D <= LANES
    assert all(S % g["s"] == 0 for g in schedule)
    assert num_heads == 2 * num_groups, "kernel assumes 2 heads per dilation group"

    geo, offs = _pack_geometry(B, S, D, DH, num_groups, schedule)
    xs = jnp.stack([query.reshape(M, D), key.reshape(M, D), value.reshape(M, D)],
                   axis=0).astype(jnp.bfloat16)

    kernel = partial(_mhda_kernel, M=M, D=D, use_ln=layer_norm, eps=layer_norm_eps,
                     **offs)
    out = pl.pallas_call(
        kernel,
        out_shape=jax.ShapeDtypeStruct((M, LANES), jnp.float32),
        in_specs=[VMEM] * 5,
        out_specs=VMEM,
    )(xs, params["w_qkv"], params["w_o"], params["par"], geo)

    return out[:, :D].reshape(B, S, D)


# ================================ deterministic init ================================
def init_mhda_params(key, embed_dim=EMBED_DIM, gamma_init=GAMMA_INIT):
    """torch _reset_parameters(): xavier_normal_ weights (v/out use gain=gamma_init),
    zero biases, LayerNorm gamma=1 / beta=0.  Everything is packed / transposed /
    cast ONCE here so the kernel never reshapes, transposes or concatenates."""
    kq, kk, kv, ko = jax.random.split(key, 4)

    def xavier_normal(k, fan_out, fan_in, gain=1.0):
        std = gain * math.sqrt(2.0 / (fan_in + fan_out))
        return jax.random.normal(k, (fan_out, fan_in), jnp.float32) * std

    D = embed_dim
    wq = xavier_normal(kq, D, D)
    wk = xavier_normal(kk, D, D)
    wv = xavier_normal(kv, D, D, gamma_init)
    wo = xavier_normal(ko, D, D, gamma_init)

    w_qkv = jnp.stack([wq.T, wk.T, wv.T], axis=0).astype(jnp.bfloat16)     # (3, D, D)
    w_o = jnp.zeros((D, LANES), jnp.float32).at[:, :D].set(wo.T)           # (D, 128)
    w_o = w_o.astype(jnp.bfloat16)
    # packed small params: rows = [b_q, b_k, b_v, ln_gamma, ln_beta, b_o (128-wide)]
    par = jnp.zeros((8, LANES), jnp.float32).at[3, :D].set(1.0)
    return {"w_qkv": w_qkv, "w_o": w_o, "par": par}


# ======================================== main =======================================
if __name__ == "__main__":
    root = jax.random.PRNGKey(0)
    k_par, k_q, k_k, k_v = jax.random.split(root, 4)
    params = init_mhda_params(k_par)

    query = jax.random.normal(k_q, (BATCH, SEQ, EMBED_DIM), jnp.float32)
    key_in = jax.random.normal(k_k, (BATCH, SEQ, EMBED_DIM), jnp.float32)
    value = jax.random.normal(k_v, (BATCH, SEQ, EMBED_DIM), jnp.float32)

    fwd = jax.jit(multihead_dilated_attention)
    out = fwd(query, key_in, value, params)
    jax.block_until_ready(out)

    assert out.shape == (BATCH, SEQ, EMBED_DIM)
    assert bool(jnp.all(jnp.isfinite(out)))
    print("KERNEL_OK")
</pallas_src>

<mosaic_0001>
module attributes {stable_mosaic.version = 11 : i64} {
  func.func @_mhda_kernel(%arg0: memref<3x16x32xbf16, #tpu.memory_space<vmem>>, %arg1: memref<3x32x32xbf16, #tpu.memory_space<vmem>>, %arg2: memref<32x128xbf16, #tpu.memory_space<vmem>>, %arg3: memref<8x128xf32, #tpu.memory_space<vmem>>, %arg4: memref<96x128xf32, #tpu.memory_space<vmem>>, %arg5: memref<16x128xf32, #tpu.memory_space<vmem>>) attributes {dimension_semantics = [], scalar_prefetch = 0 : i64, scratch_operands = 0 : i64, tpu.core_type = #tpu.core_type<tc>} {
    %c0 = arith.constant 0 : index
    %c0_0 = arith.constant 0 : index
    %0 = vector.load %arg3[%c0, %c0_0] : memref<8x128xf32, #tpu.memory_space<vmem>>, vector<1x32xf32>
    %c1 = arith.constant 1 : index
    %c0_1 = arith.constant 0 : index
    %1 = vector.load %arg3[%c1, %c0_1] : memref<8x128xf32, #tpu.memory_space<vmem>>, vector<1x32xf32>
    %c2 = arith.constant 2 : index
    %c0_2 = arith.constant 0 : index
    %2 = vector.load %arg3[%c2, %c0_2] : memref<8x128xf32, #tpu.memory_space<vmem>>, vector<1x32xf32>
    %c3 = arith.constant 3 : index
    %c0_3 = arith.constant 0 : index
    %3 = vector.load %arg3[%c3, %c0_3] : memref<8x128xf32, #tpu.memory_space<vmem>>, vector<1x32xf32>
    %c4 = arith.constant 4 : index
    %c0_4 = arith.constant 0 : index
    %4 = vector.load %arg3[%c4, %c0_4] : memref<8x128xf32, #tpu.memory_space<vmem>>, vector<1x32xf32>
    %c5 = arith.constant 5 : index
    %c0_5 = arith.constant 0 : index
    %5 = vector.load %arg3[%c5, %c0_5] : memref<8x128xf32, #tpu.memory_space<vmem>>, vector<1x128xf32>
    %c0_6 = arith.constant 0 : index
    %c0_7 = arith.constant 0 : index
    %6 = vector.load %arg4[%c0_6, %c0_7] : memref<96x128xf32, #tpu.memory_space<vmem>>, vector<32x32xf32>
    %c32 = arith.constant 32 : index
    %c0_8 = arith.constant 0 : index
    %7 = vector.load %arg4[%c32, %c0_8] : memref<96x128xf32, #tpu.memory_space<vmem>>, vector<32x32xf32>
    %c64 = arith.constant 64 : index
    %c0_9 = arith.constant 0 : index
    %8 = vector.load %arg4[%c64, %c0_9] : memref<96x128xf32, #tpu.memory_space<vmem>>, vector<16x16xf32>
    %c80 = arith.constant 80 : index
    %c0_10 = arith.constant 0 : index
    %9 = vector.load %arg4[%c80, %c0_10] : memref<96x128xf32, #tpu.memory_space<vmem>>, vector<16x32xf32>
    %c0_11 = arith.constant 0 : index
    %c0_12 = arith.constant 0 : index
    %c0_13 = arith.constant 0 : index
    %10 = vector.load %arg0[%c0_11, %c0_12, %c0_13] : memref<3x16x32xbf16, #tpu.memory_space<vmem>>, vector<1x16x32xbf16>
    %11 = vector.shape_cast %10 : vector<1x16x32xbf16> to vector<16x32xbf16>
    %c0_14 = arith.constant 0 : index
    %c0_15 = arith.constant 0 : index
    %c0_16 = arith.constant 0 : index
    %12 = vector.load %arg1[%c0_14, %c0_15, %c0_16] : memref<3x32x32xbf16, #tpu.memory_space<vmem>>, vector<1x32x32xbf16>
    %13 = vector.shape_cast %12 : vector<1x32x32xbf16> to vector<32x32xbf16>
    %cst = arith.constant dense<0.000000e+00> : vector<16x32xf32>
    %14 = tpu.matmul %11, %13, %cst {dimension_numbers = #tpu.dot_dimension_numbers<[1], [0], [0], [1], [0, 0, 1, 1], [], []>} : vector<16x32xbf16>, vector<32x32xbf16>, vector<16x32xf32> -> vector<16x32xf32>
    %15 = vector.broadcast %0 : vector<1x32xf32> to vector<16x32xf32>
    %16 = arith.addf %14, %15 : vector<16x32xf32>
    %c1_17 = arith.constant 1 : index
    %c0_18 = arith.constant 0 : index
    %c0_19 = arith.constant 0 : index
    %17 = vector.load %arg0[%c1_17, %c0_18, %c0_19] : memref<3x16x32xbf16, #tpu.memory_space<vmem>>, vector<1x16x32xbf16>
    %18 = vector.shape_cast %17 : vector<1x16x32xbf16> to vector<16x32xbf16>
    %c1_20 = arith.constant 1 : index
    %c0_21 = arith.constant 0 : index
    %c0_22 = arith.constant 0 : index
    %19 = vector.load %arg1[%c1_20, %c0_21, %c0_22] : memref<3x32x32xbf16, #tpu.memory_space<vmem>>, vector<1x32x32xbf16>
    %20 = vector.shape_cast %19 : vector<1x32x32xbf16> to vector<32x32xbf16>
    %cst_23 = arith.constant dense<0.000000e+00> : vector<16x32xf32>
    %21 = tpu.matmul %18, %20, %cst_23 {dimension_numbers = #tpu.dot_dimension_numbers<[1], [0], [0], [1], [0, 0, 1, 1], [], []>} : vector<16x32xbf16>, vector<32x32xbf16>, vector<16x32xf32> -> vector<16x32xf32>
    %22 = vector.broadcast %1 : vector<1x32xf32> to vector<16x32xf32>
    %23 = arith.addf %21, %22 : vector<16x32xf32>
    %c2_24 = arith.constant 2 : index
    %c0_25 = arith.constant 0 : index
    %c0_26 = arith.constant 0 : index
    %24 = vector.load %arg0[%c2_24, %c0_25, %c0_26] : memref<3x16x32xbf16, #tpu.memory_space<vmem>>, vector<1x16x32xbf16>
    %25 = vector.shape_cast %24 : vector<1x16x32xbf16> to vector<16x32xbf16>
    %c2_27 = arith.constant 2 : index
    %c0_28 = arith.constant 0 : index
    %c0_29 = arith.constant 0 : index
    %26 = vector.load %arg1[%c2_27, %c0_28, %c0_29] : memref<3x32x32xbf16, #tpu.memory_space<vmem>>, vector<1x32x32xbf16>
    %27 = vector.shape_cast %26 : vector<1x32x32xbf16> to vector<32x32xbf16>
    %cst_30 = arith.constant dense<0.000000e+00> : vector<16x32xf32>
    %28 = tpu.matmul %25, %27, %cst_30 {dimension_numbers = #tpu.dot_dimension_numbers<[1], [0], [0], [1], [0, 0, 1, 1], [], []>} : vector<16x32xbf16>, vector<32x32xbf16>, vector<16x32xf32> -> vector<16x32xf32>
    %29 = vector.broadcast %2 : vector<1x32xf32> to vector<16x32xf32>
    %30 = arith.addf %28, %29 : vector<16x32xf32>
    %cst_31 = arith.constant dense<0.000000e+00> : vector<16x32xf32>
    %31 = tpu.matmul %23, %7, %cst_31 {dimension_numbers = #tpu.dot_dimension_numbers<[1], [0], [0], [1], [0, 0, 1, 1], [], []>} : vector<16x32xf32>, vector<32x32xf32>, vector<16x32xf32> -> vector<16x32xf32>
    %cst_32 = arith.constant dense<0.000000e+00> : vector<16x32xf32>
    %32 = tpu.matmul %30, %7, %cst_32 {dimension_numbers = #tpu.dot_dimension_numbers<[1], [0], [0], [1], [0, 0, 1, 1], [], []>} : vector<16x32xf32>, vector<32x32xf32>, vector<16x32xf32> -> vector<16x32xf32>
    %33 = arith.mulf %16, %23 : vector<16x32xf32>
    %cst_33 = arith.constant dense<0.000000e+00> : vector<16x32xf32>
    %34 = tpu.matmul %33, %6, %cst_33 {dimension_numbers = #tpu.dot_dimension_numbers<[1], [0], [0], [1], [0, 0, 1, 1], [], []>} : vector<16x32xf32>, vector<32x32xf32>, vector<16x32xf32> -> vector<16x32xf32>
    %35 = arith.mulf %16, %31 : vector<16x32xf32>
    %cst_34 = arith.constant dense<0.000000e+00> : vector<16x32xf32>
    %36 = tpu.matmul %35, %6, %cst_34 {dimension_numbers = #tpu.dot_dimension_numbers<[1], [0], [0], [1], [0, 0, 1, 1], [], []>} : vector<16x32xf32>, vector<32x32xf32>, vector<16x32xf32> -> vector<16x32xf32>
    %37 = arith.maximumf %34, %36 : vector<16x32xf32>
    %38 = arith.subf %34, %37 : vector<16x32xf32>
    %39 = math.exp %38 : vector<16x32xf32>
    %40 = arith.subf %36, %37 : vector<16x32xf32>
    %41 = math.exp %40 : vector<16x32xf32>
    %42 = arith.addf %39, %41 : vector<16x32xf32>
    %43 = tpu.reciprocal %42 {approx = true} : vector<16x32xf32> -> vector<16x32xf32>
    %44 = arith.mulf %39, %30 : vector<16x32xf32>
    %45 = arith.mulf %41, %32 : vector<16x32xf32>
    %46 = arith.addf %44, %45 : vector<16x32xf32>
    %47 = arith.mulf %46, %43 : vector<16x32xf32>
    %48 = arith.mulf %47, %9 : vector<16x32xf32>
    %cst_35 = arith.constant dense<0.000000e+00> : vector<16x32xf32>
    %49 = tpu.matmul %8, %48, %cst_35 {dimension_numbers = #tpu.dot_dimension_numbers<[1], [0], [0], [1], [0, 0, 1, 1], [], []>} : vector<16x16xf32>, vector<16x32xf32>, vector<16x32xf32> -> vector<16x32xf32>
    %50 = tpu.reciprocal %49 {approx = true} : vector<16x32xf32> -> vector<16x32xf32>
    %51 = arith.mulf %48, %50 : vector<16x32xf32>
    %cst_36 = arith.constant dense<0.000000e+00> : vector<16xf32>
    %52 = vector.multi_reduction <add>, %51, %cst_36 [1] : vector<16x32xf32> to vector<16xf32>
    %53 = vector.shape_cast %52 : vector<16xf32> to vector<16x1xf32>
    %cst_37 = arith.constant 3.200000e+01 : f32
    %54 = vector.broadcast %cst_37 : f32 to vector<16x1xf32>
    %55 = arith.divf %53, %54 : vector<16x1xf32>
    %56 = vector.broadcast %55 : vector<16x1xf32> to vector<16x32xf32>
    %57 = arith.subf %51, %56 : vector<16x32xf32>
    %58 = arith.mulf %57, %57 : vector<16x32xf32>
    %cst_38 = arith.constant dense<0.000000e+00> : vector<16xf32>
    %59 = vector.multi_reduction <add>, %58, %cst_38 [1] : vector<16x32xf32> to vector<16xf32>
    %60 = vector.shape_cast %59 : vector<16xf32> to vector<16x1xf32>
    %cst_39 = arith.constant 3.200000e+01 : f32
    %61 = vector.broadcast %cst_39 : f32 to vector<16x1xf32>
    %62 = arith.divf %60, %61 : vector<16x1xf32>
    %cst_40 = arith.constant 9.99999974E-6 : f32
    %63 = vector.broadcast %cst_40 : f32 to vector<16x1xf32>
    %64 = arith.addf %62, %63 : vector<16x1xf32>
    %65 = math.rsqrt %64 : vector<16x1xf32>
    %66 = vector.broadcast %65 : vector<16x1xf32> to vector<16x32xf32>
    %67 = arith.mulf %57, %66 : vector<16x32xf32>
    %68 = vector.broadcast %3 : vector<1x32xf32> to vector<16x32xf32>
    %69 = arith.mulf %67, %68 : vector<16x32xf32>
    %70 = vector.broadcast %4 : vector<1x32xf32> to vector<16x32xf32>
    %71 = arith.addf %69, %70 : vector<16x32xf32>
    %72 = arith.truncf %71 : vector<16x32xf32> to vector<16x32xbf16>
    %c0_41 = arith.constant 0 : index
    %c0_42 = arith.constant 0 : index
    %73 = vector.load %arg2[%c0_41, %c0_42] : memref<32x128xbf16, #tpu.memory_space<vmem>>, vector<32x128xbf16>
    %cst_43 = arith.constant dense<0.000000e+00> : vector<16x128xf32>
    %74 = tpu.matmul %72, %73, %cst_43 {dimension_numbers = #tpu.dot_dimension_numbers<[1], [0], [0], [1], [0, 0, 1, 1], [], []>} : vector<16x32xbf16>, vector<32x128xbf16>, vector<16x128xf32> -> vector<16x128xf32>
    %75 = vector.broadcast %5 : vector<1x128xf32> to vector<16x128xf32>
    %76 = arith.addf %74, %75 : vector<16x128xf32>
    %c0_44 = arith.constant 0 : index
    %c0_45 = arith.constant 0 : index
    %77 = vector.load %arg5[%c0_44, %c0_45] : memref<16x128xf32, #tpu.memory_space<vmem>>, vector<16x128xf32>
    tpu.vector_store %arg5[%c0_44, %c0_45], %76 {strides = array<i32>} : memref<16x128xf32, #tpu.memory_space<vmem>>, vector<16x128xf32>,
    return
  }
}

</mosaic_0001>

<llo_original>
// kernel: multihead_dilated_attention.1
$region0: #{multihead_dilated_attention.1}
  #allocation0 [shape = 'u32[]', space=smem, size = 0x4, offset = 0x4, fixed_abs, tag = 'smem constant byte address 0x4 - core index']
  #allocation1 [shape = 'u32[144,128]{1,0:T(1,128)}', space=vmem, size = 0x12000, scoped, tag = 'internal scratch']
  %s0 = inlined_call_operand.vmem [shape: bf16[3,16,32], index: 0, kind: input, shape index: {}]
  %s1 = inlined_call_operand.hbm [shape: bf16[3,32,32], index: 1, kind: input, shape index: {}]
  %s2 = inlined_call_operand.vmem [shape: bf16[32,128], index: 2, kind: input, shape index: {}]
  %s3 = inlined_call_operand.vmem [shape: f32[8,128], index: 3, kind: input, shape index: {}]
  %s4 = inlined_call_operand.vmem [shape: f32[96,128], index: 4, kind: input, shape index: {}]
  %s5 = inlined_call_operand.vmem [shape: f32[16,128], index: 5, kind: output, shape index: {}]
  %s6 = sld [smem:[#allocation0]]
  $region34: #{multihead_dilated_attention.1} parent=0
    _
  %s8 = ssub.s32 1, %s6
  %s9 = scalar_select 0, %s8, %s6
  $region1: #{multihead_dilated_attention.1} parent=0
    #allocation2 [shape = 'u8[24576]{0}', space=vmem, size = 0x6000, scoped, tag = 'input window, operand 1, single buffered']
    #allocation3 [shape = 's32[1]{0}', space=sflag, size = 0x4, scoped, tag = 'scoped memory for multihead_dilated_attention.1']
    %10 = vsyncpa [#allocation3], 0
    // Predicated region
    $region2: #{multihead_dilated_attention.1} parent=1 // pred_check
      _
    $region3: #{multihead_dilated_attention.1} parent=1 // pred_check_branch
      %12 = sbr.rel (0) target = $region5
    $region4: #{multihead_dilated_attention.1} parent=1 // pred_region
      _
    $region5: #{multihead_dilated_attention.1} parent=1 // pred_fallthru
      _
    // Predicated region
    $region6: #{multihead_dilated_attention.1} parent=1 // pred_check
      _
    $region7: #{multihead_dilated_attention.1} parent=1 // pred_check_branch
      %14 = sbr.rel (0) target = $region9
    $region8: #{multihead_dilated_attention.1} parent=1 // pred_region
      %s16 = ssub.s32 768, 768
      %17 = vsyncadd [#allocation3], %s16
      %s18 = sshll.u32 [#allocation2], 4
      %s19 = int_to_ptr.vmem [resolvable:$true] %s18
      %24 = dma.hbm_to_vmem [thread:$0]  %s1, 768, %s19, [#allocation3], 64, 64, 4
    $region9: #{multihead_dilated_attention.1} parent=1 // pred_fallthru
      _
    // Predicated region
    $region10: #{multihead_dilated_attention.1} parent=1 // pred_check
      _
    $region11: #{multihead_dilated_attention.1} parent=1 // pred_check_branch
      %26 = sbr.rel (0) target = $region13
    $region12: #{multihead_dilated_attention.1} parent=1 // pred_region
      _
    $region13: #{multihead_dilated_attention.1} parent=1 // pred_fallthru
      _
    // Predicated region
    $region14: #{multihead_dilated_attention.1} parent=1 // pred_check
      _
    $region15: #{multihead_dilated_attention.1} parent=1 // pred_check_branch
      %28 = sbr.rel (0) target = $region17
    $region16: #{multihead_dilated_attention.1} parent=1 // pred_region
      _
    $region17: #{multihead_dilated_attention.1} parent=1 // pred_fallthru
      _
    // Predicated region
    $region18: #{multihead_dilated_attention.1} parent=1 // pred_check
      _
    $region19: #{multihead_dilated_attention.1} parent=1 // pred_check_branch
      %30 = sbr.rel (0) target = $region21
    $region20: #{multihead_dilated_attention.1} parent=1 // pred_region
      _
    $region21: #{multihead_dilated_attention.1} parent=1 // pred_fallthru
      _
    // Predicated region
    $region22: #{multihead_dilated_attention.1} parent=1 // pred_check
      _
    $region23: #{multihead_dilated_attention.1} parent=1 // pred_check_branch
      %32 = sbr.rel (0) target = $region25
    $region24: #{multihead_dilated_attention.1} parent=1 // pred_region
      %33 = dma.done [#allocation3], 768
    $region25: #{multihead_dilated_attention.1} parent=1 // pred_fallthru
      _
    %v35 = vld [vmem:[%s3] sm:$0x1]
    %v36 = vld [vmem:[%s3 + $0x1] sm:$0x1]
    %v37 = vld [vmem:[%s3 + $0x2] sm:$0x1]
    %v38 = vld [vmem:[%s3 + $0x3] sm:$0x1]
    %v39 = vld [vmem:[%s3 + $0x4] sm:$0x1]
    %v40 = vld [vmem:[%s3 + $0x5] sm:$0x1]
    %v41 = vld [vmem:[%s4] sm:$0xff]
    %v42 = vld [vmem:[%s4 + $0x8] sm:$0xff]
    %v43 = vld [vmem:[%s4 + $0x10] sm:$0xff]
    %v44 = vld [vmem:[%s4 + $0x18] sm:$0xff]
    %v45 = vld [vmem:[%s4 + $0x20] sm:$0xff]
    %v46 = vld [vmem:[%s4 + $0x28] sm:$0xff]
    %v47 = vld [vmem:[%s4 + $0x30] sm:$0xff]
    %v48 = vld [vmem:[%s4 + $0x38] sm:$0xff]
    %v49 = vld [vmem:[%s4 + $0x40] sm:$0xff]
    %v50 = vld [vmem:[%s4 + $0x48] sm:$0xff]
    %v51 = vld [vmem:[%s4 + $0x50] sm:$0xff]
    %v52 = vld [vmem:[%s4 + $0x58] sm:$0xff]
    %v53 = vld [vmem:[%s0] sm:$0xf]
    %v54 = vld [vmem:[%s0 + $0x4] sm:$0xf]
    %v55 = vld [vmem:[#allocation2] sm:$0xf]
    %v56 = vld [vmem:[#allocation2 + $0x4] sm:$0xf]
    %v57 = vld [vmem:[#allocation2 + $0x8] sm:$0xf]
    %v58 = vld [vmem:[#allocation2 + $0xc] sm:$0xf]
    %v59 = vlaneseq
    %v60 = vshrl.u32 %v59, 7
    %v61 = vsub.s32 0, %v60
    %v62 = vrot.slane %v35, %v61
    %v65 = vunpack.c.l.b16 %v53
    %v66 = vunpack.c.l.b16 %v54
    %v67 = vpack.c.b16 %v66, %v65
    %v72 = vunpack.c.l.b16 %v55
    %v73 = vunpack.c.l.b16 %v56
    %v74 = vunpack.c.l.b16 %v57
    %v75 = vunpack.c.l.b16 %v58
    %v76 = vpack.c.b16 %v73, %v72
    %v77 = vpack.c.b16 %v75, %v74
    %vm80 = vcmask 261120
    %v82 = vsel %vm80, %v67, 0
    %84 = vmatprep.subr.bf16.mxu0 0
    %85 = vmatpush1.bf16.msra.mxu0 0
    %86 = vmatprep.subr.bf16.mxu0 0
    %87 = vmatpush1.bf16.msra.mxu0 0
    %88 = vmatprep.subr.bf16.mxu0 0
    %89 = vmatpush1.bf16.msra.mxu0 0
    %90 = vmatprep.subr.bf16.mxu0 0
    %91 = vmatpush1.bf16.msra.mxu0 0
    %92 = vmatprep.subr.bf16.mxu0 0
    %93 = vmatpush1.bf16.msra.mxu0 0
    %94 = vmatprep.subr.bf16.mxu0 0
    %95 = vmatpush1.bf16.msra.mxu0 0
    %96 = vmatprep.subr.bf16.mxu0 0
    %97 = vmatpush1.bf16.msra.mxu0 %v77
    %98 = vmatprep.subr.bf16.mxu0 0
    %99 = vmatpush1.bf16.msra.mxu0 %v76
    %100 = vmatprep.subr.bf16.mxu0 0
    %101 = vmatpush2.bf16.msra.mxu0 0
    %102 = vmatprep.subr.bf16.mxu0 0
    %103 = vmatpush2.bf16.msra.mxu0 0
    %104 = vmatprep.subr.bf16.mxu0 0
    %105 = vmatpush2.bf16.msra.mxu0 0
    %106 = vmatprep.subr.bf16.mxu0 0
    %107 = vmatpush2.bf16.msra.mxu0 0
    %108 = vmatprep.subr.bf16.mxu0 0
    %109 = vmatpush2.bf16.msra.mxu0 0
    %110 = vmatprep.subr.bf16.mxu0 0
    %111 = vmatpush2.bf16.msra.mxu0 0
    %112 = vmatprep.subr.bf16.mxu0 0
    %113 = vmatpush2.bf16.msra.mxu0 0
    %114 = vmatprep.subr.bf16.mxu0 0
    %115 = vmatpush2.bf16.msra.mxu0 0
    %116 = vmatprep.mubr.bf16.mxu0 0
    %117 = vmatmul.mubr.bf16.gmra.mxu0 %v82
    %v118 = vpop.f32.mrf.mxu0
    %v119 = vadd.f32 %v62, %v118
    %v120 = vpop.f32.mrf.mxu0
    %v121 = vpop.f32.mrf.mxu0
    %v122 = vadd.f32 %v62, %v121
    %v123 = vpop.f32.mrf.mxu0
    %124 = vdwg.mxu0
    %s125 = scalar_lea.vmem %s0, 8
    %v126 = vld [vmem:[%s125] sm:$0xf]
    %v127 = vld [vmem:[%s125 + $0x4] sm:$0xf]
    %s128 = scalar_lea.vmem [#allocation2], 16
    %v129 = vld [vmem:[%s128] sm:$0xf]
    %v130 = vld [vmem:[%s128 + $0x4] sm:$0xf]
    %v131 = vld [vmem:[%s128 + $0x8] sm:$0xf]
    %v132 = vld [vmem:[%s128 + $0xc] sm:$0xf]
    %v133 = vlaneseq
    %v134 = vshrl.u32 %v133, 7
    %v135 = vsub.s32 0, %v134
    %v136 = vrot.slane %v36, %v135
    %v139 = vunpack.c.l.b16 %v126
    %v140 = vunpack.c.l.b16 %v127
    %v141 = vpack.c.b16 %v140, %v139
    %v146 = vunpack.c.l.b16 %v129
    %v147 = vunpack.c.l.b16 %v130
    %v148 = vunpack.c.l.b16 %v131
    %v149 = vunpack.c.l.b16 %v132
    %v150 = vpack.c.b16 %v147, %v146
    %v151 = vpack.c.b16 %v149, %v148
    %v155 = vsel %vm80, %v141, 0
    %157 = vmatprep.subr.bf16.mxu0 0
    %158 = vmatpush1.bf16.msra.mxu0 0
    %159 = vmatprep.subr.bf16.mxu0 0
    %160 = vmatpush1.bf16.msra.mxu0 0
    %161 = vmatprep.subr.bf16.mxu0 0
    %162 = vmatpush1.bf16.msra.mxu0 0
    %163 = vmatprep.subr.bf16.mxu0 0
    %164 = vmatpush1.bf16.msra.mxu0 0
    %165 = vmatprep.subr.bf16.mxu0 0
    %166 = vmatpush1.bf16.msra.mxu0 0
    %167 = vmatprep.subr.bf16.mxu0 0
    %168 = vmatpush1.bf16.msra.mxu0 0
    %169 = vmatprep.subr.bf16.mxu0 0
    %170 = vmatpush1.bf16.msra.mxu0 %v151
    %171 = vmatprep.subr.bf16.mxu0 0
    %172 = vmatpush1.bf16.msra.mxu0 %v150
    %173 = vmatprep.subr.bf16.mxu0 0
    %174 = vmatpush2.bf16.msra.mxu0 0
    %175 = vmatprep.subr.bf16.mxu0 0
    %176 = vmatpush2.bf16.msra.mxu0 0
    %177 = vmatprep.subr.bf16.mxu0 0
    %178 = vmatpush2.bf16.msra.mxu0 0
    %179 = vmatprep.subr.bf16.mxu0 0
    %180 = vmatpush2.bf16.msra.mxu0 0
    %181 = vmatprep.subr.bf16.mxu0 0
    %182 = vmatpush2.bf16.msra.mxu0 0
    %183 = vmatprep.subr.bf16.mxu0 0
    %184 = vmatpush2.bf16.msra.mxu0 0
    %185 = vmatprep.subr.bf16.mxu0 0
    %186 = vmatpush2.bf16.msra.mxu0 0
    %187 = vmatprep.subr.bf16.mxu0 0
    %188 = vmatpush2.bf16.msra.mxu0 0
    %189 = vmatprep.mubr.bf16.mxu0 0
    %190 = vmatmul.mubr.bf16.gmra.mxu0 %v155
    %v191 = vpop.f32.mrf.mxu0
    %v192 = vadd.f32 %v136, %v191
    %v193 = vpop.f32.mrf.mxu0
    %v194 = vpop.f32.mrf.mxu0
    %v195 = vadd.f32 %v136, %v194
    %v196 = vpop.f32.mrf.mxu0
    %197 = vdwg.mxu0
    %s198 = scalar_lea.vmem %s0, 16
    %v199 = vld [vmem:[%s198] sm:$0xf]
    %v200 = vld [vmem:[%s198 + $0x4] sm:$0xf]
    %s201 = scalar_lea.vmem [#allocation2], 32
    %v202 = vld [vmem:[%s201] sm:$0xf]
    %v203 = vld [vmem:[%s201 + $0x4] sm:$0xf]
    %v204 = vld [vmem:[%s201 + $0x8] sm:$0xf]
    %v205 = vld [vmem:[%s201 + $0xc] sm:$0xf]
    %v206 = vlaneseq
    %v207 = vshrl.u32 %v206, 7
    %v208 = vsub.s32 0, %v207
    %v209 = vrot.slane %v37, %v208
    %v212 = vunpack.c.l.b16 %v199
    %v213 = vunpack.c.l.b16 %v200
    %v214 = vpack.c.b16 %v213, %v212
    %v219 = vunpack.c.l.b16 %v202
    %v220 = vunpack.c.l.b16 %v203
    %v221 = vunpack.c.l.b16 %v204
    %v222 = vunpack.c.l.b16 %v205
    %v223 = vpack.c.b16 %v220, %v219
    %v224 = vpack.c.b16 %v222, %v221
    %v228 = vsel %vm80, %v214, 0
    %230 = vmatprep.subr.bf16.mxu0 0
    %231 = vmatpush1.bf16.msra.mxu0 0
    %232 = vmatprep.subr.bf16.mxu0 0
    %233 = vmatpush1.bf16.msra.mxu0 0
    %234 = vmatprep.subr.bf16.mxu0 0
    %235 = vmatpush1.bf16.msra.mxu0 0
    %236 = vmatprep.subr.bf16.mxu0 0
    %237 = vmatpush1.bf16.msra.mxu0 0
    %238 = vmatprep.subr.bf16.mxu0 0
    %239 = vmatpush1.bf16.msra.mxu0 0
    %240 = vmatprep.subr.bf16.mxu0 0
    %241 = vmatpush1.bf16.msra.mxu0 0
    %242 = vmatprep.subr.bf16.mxu0 0
    %243 = vmatpush1.bf16.msra.mxu0 %v224
    %244 = vmatprep.subr.bf16.mxu0 0
    %245 = vmatpush1.bf16.msra.mxu0 %v223
    %246 = vmatprep.subr.bf16.mxu0 0
    %247 = vmatpush2.bf16.msra.mxu0 0
    %248 = vmatprep.subr.bf16.mxu0 0
    %249 = vmatpush2.bf16.msra.mxu0 0
    %250 = vmatprep.subr.bf16.mxu0 0
    %251 = vmatpush2.bf16.msra.mxu0 0
    %252 = vmatprep.subr.bf16.mxu0 0
    %253 = vmatpush2.bf16.msra.mxu0 0
    %254 = vmatprep.subr.bf16.mxu0 0
    %255 = vmatpush2.bf16.msra.mxu0 0
    %256 = vmatprep.subr.bf16.mxu0 0
    %257 = vmatpush2.bf16.msra.mxu0 0
    %258 = vmatprep.subr.bf16.mxu0 0
    %259 = vmatpush2.bf16.msra.mxu0 0
    %260 = vmatprep.subr.bf16.mxu0 0
    %261 = vmatpush2.bf16.msra.mxu0 0
    %262 = vmatprep.mubr.bf16.mxu0 0
    %263 = vmatmul.mubr.bf16.gmra.mxu0 %v228
    %v264 = vpop.f32.mrf.mxu0
    %v265 = vadd.f32 %v209, %v264
    %v266 = vpop.f32.mrf.mxu0
    %v267 = vpop.f32.mrf.mxu0
    %v268 = vadd.f32 %v209, %v267
    %v269 = vpop.f32.mrf.mxu0
    %270 = vdwg.mxu0
    %v272 = vsel %vm80, %v192, 0
    %v275 = vsel %vm80, %v195, 0
    %277 = vmatprep.subr.mxu0 0.0
    %278 = vmatpush1.msra.mxu0 0.0
    %279 = vmatprep.subr.mxu0 0.0
    %280 = vmatpush1.msra.mxu0 0.0
    %281 = vmatprep.subr.mxu0 0.0
    %282 = vmatpush1.msra.mxu0 0.0
    %283 = vmatprep.subr.mxu0 0.0
    %284 = vmatpush1.msra.mxu0 0.0
    %285 = vmatprep.subr.mxu0 0.0
    %286 = vmatpush1.msra.mxu0 0.0
    %287 = vmatprep.subr.mxu0 0.0
    %288 = vmatpush1.msra.mxu0 0.0
    %289 = vmatprep.subr.mxu0 0.0
    %290 = vmatpush1.msra.mxu0 0.0
    %291 = vmatprep.subr.mxu0 0.0
    %292 = vmatpush1.msra.mxu0 0.0
    %293 = vmatprep.subr.mxu0 0.0
    %294 = vmatpush1.msra.mxu0 0.0
    %295 = vmatprep.subr.mxu0 0.0
    %296 = vmatpush1.msra.mxu0 0.0
    %297 = vmatprep.subr.mxu0 0.0
    %298 = vmatpush1.msra.mxu0 0.0
    %299 = vmatprep.subr.mxu0 0.0
    %300 = vmatpush1.msra.mxu0 0.0
    %301 = vmatprep.subr.mxu0 0.0
    %302 = vmatpush1.msra.mxu0 %v48
    %303 = vmatprep.subr.mxu0 0.0
    %304 = vmatpush1.msra.mxu0 %v47
    %305 = vmatprep.subr.mxu0 0.0
    %306 = vmatpush1.msra.mxu0 %v46
    %307 = vmatprep.subr.mxu0 0.0
    %308 = vmatpush1.msra.mxu0 %v45
    %309 = vmatprep.subr.mxu0 0.0
    %310 = vmatpush2.msra.mxu0 0.0
    %311 = vmatprep.subr.mxu0 0.0
    %312 = vmatpush2.msra.mxu0 0.0
    %313 = vmatprep.subr.mxu0 0.0
    %314 = vmatpush2.msra.mxu0 0.0
    %315 = vmatprep.subr.mxu0 0.0
    %316 = vmatpush2.msra.mxu0 0.0
    %317 = vmatprep.subr.mxu0 0.0
    %318 = vmatpush2.msra.mxu0 0.0
    %319 = vmatprep.subr.mxu0 0.0
    %320 = vmatpush2.msra.mxu0 0.0
    %321 = vmatprep.subr.mxu0 0.0
    %322 = vmatpush2.msra.mxu0 0.0
    %323 = vmatprep.subr.mxu0 0.0
    %324 = vmatpush2.msra.mxu0 0.0
    %325 = vmatprep.subr.mxu0 0.0
    %326 = vmatpush2.msra.mxu0 0.0
    %327 = vmatprep.subr.mxu0 0.0
    %328 = vmatpush2.msra.mxu0 0.0
    %329 = vmatprep.subr.mxu0 0.0
    %330 = vmatpush2.msra.mxu0 0.0
    %331 = vmatprep.subr.mxu0 0.0
    %332 = vmatpush2.msra.mxu0 0.0
    %333 = vmatprep.subr.mxu0 0.0
    %334 = vmatpush2.msra.mxu0 0.0
    %335 = vmatprep.subr.mxu0 0.0
    %336 = vmatpush2.msra.mxu0 0.0
    %337 = vmatprep.subr.mxu0 0.0
    %338 = vmatpush2.msra.mxu0 0.0
    %339 = vmatprep.subr.mxu0 0.0
    %340 = vmatpush2.msra.mxu0 0.0
    %341 = vmatprep.mubr.f32.mxu0 0.0
    %342 = vmatmul.mubr.f32.gmra.mxu0 %v272
    %v343 = vpop.f32.mrf.mxu0
    %v344 = vadd.f32 0.0, %v343
    %v345 = vpop.f32.mrf.mxu0
    %346 = vmatprep.mubr.f32.mxu0 0.0
    %347 = vmatmul.mubr.f32.gmra.mxu0 %v275
    %v348 = vpop.f32.mrf.mxu0
    %v349 = vadd.f32 0.0, %v348
    %v350 = vpop.f32.mrf.mxu0
    %351 = vdwg.mxu0
    %v353 = vsel %vm80, %v265, 0
    %v356 = vsel %vm80, %v268, 0
    %358 = vmatprep.subr.mxu0 0.0
    %359 = vmatpush1.msra.mxu0 0.0
    %360 = vmatprep.subr.mxu0 0.0
    %361 = vmatpush1.msra.mxu0 0.0
    %362 = vmatprep.subr.mxu0 0.0
    %363 = vmatpush1.msra.mxu0 0.0
    %364 = vmatprep.subr.mxu0 0.0
    %365 = vmatpush1.msra.mxu0 0.0
    %366 = vmatprep.subr.mxu0 0.0
    %367 = vmatpush1.msra.mxu0 0.0
    %368 = vmatprep.subr.mxu0 0.0
    %369 = vmatpush1.msra.mxu0 0.0
    %370 = vmatprep.subr.mxu0 0.0
    %371 = vmatpush1.msra.mxu0 0.0
    %372 = vmatprep.subr.mxu0 0.0
    %373 = vmatpush1.msra.mxu0 0.0
    %374 = vmatprep.subr.mxu0 0.0
    %375 = vmatpush1.msra.mxu0 0.0
    %376 = vmatprep.subr.mxu0 0.0
    %377 = vmatpush1.msra.mxu0 0.0
    %378 = vmatprep.subr.mxu0 0.0
    %379 = vmatpush1.msra.mxu0 0.0
    %380 = vmatprep.subr.mxu0 0.0
    %381 = vmatpush1.msra.mxu0 0.0
    %382 = vmatprep.subr.mxu0 0.0
    %383 = vmatpush1.msra.mxu0 %v48
    %384 = vmatprep.subr.mxu0 0.0
    %385 = vmatpush1.msra.mxu0 %v47
    %386 = vmatprep.subr.mxu0 0.0
    %387 = vmatpush1.msra.mxu0 %v46
    %388 = vmatprep.subr.mxu0 0.0
    %389 = vmatpush1.msra.mxu0 %v45
    %390 = vmatprep.subr.mxu0 0.0
    %391 = vmatpush2.msra.mxu0 0.0
    %392 = vmatprep.subr.mxu0 0.0
    %393 = vmatpush2.msra.mxu0 0.0
    %394 = vmatprep.subr.mxu0 0.0
    %395 = vmatpush2.msra.mxu0 0.0
    %396 = vmatprep.subr.mxu0 0.0
    %397 = vmatpush2.msra.mxu0 0.0
    %398 = vmatprep.subr.mxu0 0.0
    %399 = vmatpush2.msra.mxu0 0.0
    %400 = vmatprep.subr.mxu0 0.0
    %401 = vmatpush2.msra.mxu0 0.0
    %402 = vmatprep.subr.mxu0 0.0
    %403 = vmatpush2.msra.mxu0 0.0
    %404 = vmatprep.subr.mxu0 0.0
    %405 = vmatpush2.msra.mxu0 0.0
    %406 = vmatprep.subr.mxu0 0.0
    %407 = vmatpush2.msra.mxu0 0.0
    %408 = vmatprep.subr.mxu0 0.0
    %409 = vmatpush2.msra.mxu0 0.0
    %410 = vmatprep.subr.mxu0 0.0
    %411 = vmatpush2.msra.mxu0 0.0
    %412 = vmatprep.subr.mxu0 0.0
    %413 = vmatpush2.msra.mxu0 0.0
    %414 = vmatprep.subr.mxu0 0.0
    %415 = vmatpush2.msra.mxu0 0.0
    %416 = vmatprep.subr.mxu0 0.0
    %417 = vmatpush2.msra.mxu0 0.0
    %418 = vmatprep.subr.mxu0 0.0
    %419 = vmatpush2.msra.mxu0 0.0
    %420 = vmatprep.subr.mxu0 0.0
    %421 = vmatpush2.msra.mxu0 0.0
    %422 = vmatprep.mubr.f32.mxu0 0.0
    %423 = vmatmul.mubr.f32.gmra.mxu0 %v353
    %v424 = vpop.f32.mrf.mxu0
    %v425 = vadd.f32 0.0, %v424
    %v426 = vpop.f32.mrf.mxu0
    %427 = vmatprep.mubr.f32.mxu0 0.0
    %428 = vmatmul.mubr.f32.gmra.mxu0 %v356
    %v429 = vpop.f32.mrf.mxu0
    %v430 = vadd.f32 0.0, %v429
    %v431 = vpop.f32.mrf.mxu0
    %432 = vdwg.mxu0
    %v433 = vmul.f32 %v119, %v192
    %v434 = vmul.f32 %v122, %v195
    %v436 = vsel %vm80, %v433, 0
    %v439 = vsel %vm80, %v434, 0
    %441 = vmatprep.subr.mxu0 0.0
    %442 = vmatpush1.msra.mxu0 0.0
    %443 = vmatprep.subr.mxu0 0.0
    %444 = vmatpush1.msra.mxu0 0.0
    %445 = vmatprep.subr.mxu0 0.0
    %446 = vmatpush1.msra.mxu0 0.0
    %447 = vmatprep.subr.mxu0 0.0
    %448 = vmatpush1.msra.mxu0 0.0
    %449 = vmatprep.subr.mxu0 0.0
    %450 = vmatpush1.msra.mxu0 0.0
    %451 = vmatprep.subr.mxu0 0.0
    %452 = vmatpush1.msra.mxu0 0.0
    %453 = vmatprep.subr.mxu0 0.0
    %454 = vmatpush1.msra.mxu0 0.0
    %455 = vmatprep.subr.mxu0 0.0
    %456 = vmatpush1.msra.mxu0 0.0
    %457 = vmatprep.subr.mxu0 0.0
    %458 = vmatpush1.msra.mxu0 0.0
    %459 = vmatprep.subr.mxu0 0.0
    %460 = vmatpush1.msra.mxu0 0.0
    %461 = vmatprep.subr.mxu0 0.0
    %462 = vmatpush1.msra.mxu0 0.0
    %463 = vmatprep.subr.mxu0 0.0
    %464 = vmatpush1.msra.mxu0 0.0
    %465 = vmatprep.subr.mxu0 0.0
    %466 = vmatpush1.msra.mxu0 %v44
    %467 = vmatprep.subr.mxu0 0.0
    %468 = vmatpush1.msra.mxu0 %v43
    %469 = vmatprep.subr.mxu0 0.0
    %470 = vmatpush1.msra.mxu0 %v42
    %471 = vmatprep.subr.mxu0 0.0
    %472 = vmatpush1.msra.mxu0 %v41
    %473 = vmatprep.subr.mxu0 0.0
    %474 = vmatpush2.msra.mxu0 0.0
    %475 = vmatprep.subr.mxu0 0.0
    %476 = vmatpush2.msra.mxu0 0.0
    %477 = vmatprep.subr.mxu0 0.0
    %478 = vmatpush2.msra.mxu0 0.0
    %479 = vmatprep.subr.mxu0 0.0
    %480 = vmatpush2.msra.mxu0 0.0
    %481 = vmatprep.subr.mxu0 0.0
    %482 = vmatpush2.msra.mxu0 0.0
    %483 = vmatprep.subr.mxu0 0.0
    %484 = vmatpush2.msra.mxu0 0.0
    %485 = vmatprep.subr.mxu0 0.0
    %486 = vmatpush2.msra.mxu0 0.0
    %487 = vmatprep.subr.mxu0 0.0
    %488 = vmatpush2.msra.mxu0 0.0
    %489 = vmatprep.subr.mxu0 0.0
    %490 = vmatpush2.msra.mxu0 0.0
    %491 = vmatprep.subr.mxu0 0.0
    %492 = vmatpush2.msra.mxu0 0.0
    %493 = vmatprep.subr.mxu0 0.0
    %494 = vmatpush2.msra.mxu0 0.0
    %495 = vmatprep.subr.mxu0 0.0
    %496 = vmatpush2.msra.mxu0 0.0
    %497 = vmatprep.subr.mxu0 0.0
    %498 = vmatpush2.msra.mxu0 0.0
    %499 = vmatprep.subr.mxu0 0.0
    %500 = vmatpush2.msra.mxu0 0.0
    %501 = vmatprep.subr.mxu0 0.0
    %502 = vmatpush2.msra.mxu0 0.0
    %503 = vmatprep.subr.mxu0 0.0
    %504 = vmatpush2.msra.mxu0 0.0
    %505 = vmatprep.mubr.f32.mxu0 0.0
    %506 = vmatmul.mubr.f32.gmra.mxu0 %v436
    %v507 = vpop.f32.mrf.mxu0
    %v508 = vadd.f32 0.0, %v507
    %v509 = vpop.f32.mrf.mxu0
    %510 = vmatprep.mubr.f32.mxu0 0.0
    %511 = vmatmul.mubr.f32.gmra.mxu0 %v439
    %v512 = vpop.f32.mrf.mxu0
    %v513 = vadd.f32 0.0, %v512
    %v514 = vpop.f32.mrf.mxu0
    %515 = vdwg.mxu0
    %v516 = vmul.f32 %v119, %v344
    %v517 = vmul.f32 %v122, %v349
    %v519 = vsel %vm80, %v516, 0
    %v522 = vsel %vm80, %v517, 0
    %524 = vmatprep.subr.mxu0 0.0
    %525 = vmatpush1.msra.mxu0 0.0
    %526 = vmatprep.subr.mxu0 0.0
    %527 = vmatpush1.msra.mxu0 0.0
    %528 = vmatprep.subr.mxu0 0.0
    %529 = vmatpush1.msra.mxu0 0.0
    %530 = vmatprep.subr.mxu0 0.0
    %531 = vmatpush1.msra.mxu0 0.0
    %532 = vmatprep.subr.mxu0 0.0
    %533 = vmatpush1.msra.mxu0 0.0
    %534 = vmatprep.subr.mxu0 0.0
    %535 = vmatpush1.msra.mxu0 0.0
    %536 = vmatprep.subr.mxu0 0.0
    %537 = vmatpush1.msra.mxu0 0.0
    %538 = vmatprep.subr.mxu0 0.0
    %539 = vmatpush1.msra.mxu0 0.0
    %540 = vmatprep.subr.mxu0 0.0
    %541 = vmatpush1.msra.mxu0 0.0
    %542 = vmatprep.subr.mxu0 0.0
    %543 = vmatpush1.msra.mxu0 0.0
    %544 = vmatprep.subr.mxu0 0.0
    %545 = vmatpush1.msra.mxu0 0.0
    %546 = vmatprep.subr.mxu0 0.0
    %547 = vmatpush1.msra.mxu0 0.0
    %548 = vmatprep.subr.mxu0 0.0
    %549 = vmatpush1.msra.mxu0 %v44
    %550 = vmatprep.subr.mxu0 0.0
    %551 = vmatpush1.msra.mxu0 %v43
    %552 = vmatprep.subr.mxu0 0.0
    %553 = vmatpush1.msra.mxu0 %v42
    %554 = vmatprep.subr.mxu0 0.0
    %555 = vmatpush1.msra.mxu0 %v41
    %556 = vmatprep.subr.mxu0 0.0
    %557 = vmatpush2.msra.mxu0 0.0
    %558 = vmatprep.subr.mxu0 0.0
    %559 = vmatpush2.msra.mxu0 0.0
    %560 = vmatprep.subr.mxu0 0.0
    %561 = vmatpush2.msra.mxu0 0.0
    %562 = vmatprep.subr.mxu0 0.0
    %563 = vmatpush2.msra.mxu0 0.0
    %564 = vmatprep.subr.mxu0 0.0
    %565 = vmatpush2.msra.mxu0 0.0
    %566 = vmatprep.subr.mxu0 0.0
    %567 = vmatpush2.msra.mxu0 0.0
    %568 = vmatprep.subr.mxu0 0.0
    %569 = vmatpush2.msra.mxu0 0.0
    %570 = vmatprep.subr.mxu0 0.0
    %571 = vmatpush2.msra.mxu0 0.0
    %572 = vmatprep.subr.mxu0 0.0
    %573 = vmatpush2.msra.mxu0 0.0
    %574 = vmatprep.subr.mxu0 0.0
    %575 = vmatpush2.msra.mxu0 0.0
    %576 = vmatprep.subr.mxu0 0.0
    %577 = vmatpush2.msra.mxu0 0.0
    %578 = vmatprep.subr.mxu0 0.0
    %579 = vmatpush2.msra.mxu0 0.0
    %580 = vmatprep.subr.mxu0 0.0
    %581 = vmatpush2.msra.mxu0 0.0
    %582 = vmatprep.subr.mxu0 0.0
    %583 = vmatpush2.msra.mxu0 0.0
    %584 = vmatprep.subr.mxu0 0.0
    %585 = vmatpush2.msra.mxu0 0.0
    %586 = vmatprep.subr.mxu0 0.0
    %587 = vmatpush2.msra.mxu0 0.0
    %588 = vmatprep.mubr.f32.mxu0 0.0
    %589 = vmatmul.mubr.f32.gmra.mxu0 %v519
    %v590 = vpop.f32.mrf.mxu0
    %v591 = vadd.f32 0.0, %v590
    %v592 = vpop.f32.mrf.mxu0
    %593 = vmatprep.mubr.f32.mxu0 0.0
    %594 = vmatmul.mubr.f32.gmra.mxu0 %v522
    %v595 = vpop.f32.mrf.mxu0
    %v596 = vadd.f32 0.0, %v595
    %v597 = vpop.f32.mrf.mxu0
    %598 = vdwg.mxu0
    %v599 = vmax.f32 %v508, %v591
    %v600 = vmax.f32 %v513, %v596
    %v601 = vsub.f32 %v508, %v599
    %v602 = vsub.f32 %v513, %v600
    %v603 = vmul.f32 %v601, 1.442695
    %v604 = vpow.pop %v603
    %v605 = vmul.f32 %v602, 1.442695
    %v606 = vpow.pop %v605
    %v607 = vsub.f32 %v591, %v599
    %v608 = vsub.f32 %v596, %v600
    %v609 = vmul.f32 %v607, 1.442695
    %v610 = vpow.pop %v609
    %v611 = vmul.f32 %v608, 1.442695
    %v612 = vpow.pop %v611
    %v613 = vadd.f32 %v604, %v610
    %v614 = vadd.f32 %v606, %v612
    %v615 = vrcp.pop %v613
    %v616 = vrcp.pop %v614
    %v617 = vmul.f32 %v604, %v265
    %v618 = vmul.f32 %v606, %v268
    %v619 = vmul.f32 %v610, %v425
    %v620 = vmul.f32 %v612, %v430
    %v621 = vadd.f32 %v617, %v619
    %v622 = vadd.f32 %v618, %v620
    %v623 = vmul.f32 %v621, %v615
    %v624 = vmul.f32 %v622, %v616
    %v625 = vmul.f32 %v623, %v51
    %v626 = vmul.f32 %v624, %v52
    %vm627 = vcmask 130048
    %v629 = vsel %vm627, %v49, 0
    %v632 = vsel %vm627, %v50, 0
    %634 = vmatprep.subr.mxu0 0.0
    %635 = vmatpush1.msra.mxu0 0.0
    %636 = vmatprep.subr.mxu0 0.0
    %637 = vmatpush1.msra.mxu0 0.0
    %638 = vmatprep.subr.mxu0 0.0
    %639 = vmatpush1.msra.mxu0 0.0
    %640 = vmatprep.subr.mxu0 0.0
    %641 = vmatpush1.msra.mxu0 0.0
    %642 = vmatprep.subr.mxu0 0.0
    %643 = vmatpush1.msra.mxu0 0.0
    %644 = vmatprep.subr.mxu0 0.0
    %645 = vmatpush1.msra.mxu0 0.0
    %646 = vmatprep.subr.mxu0 0.0
    %647 = vmatpush1.msra.mxu0 0.0
    %648 = vmatprep.subr.mxu0 0.0
    %649 = vmatpush1.msra.mxu0 0.0
    %650 = vmatprep.subr.mxu0 0.0
    %651 = vmatpush1.msra.mxu0 0.0
    %652 = vmatprep.subr.mxu0 0.0
    %653 = vmatpush1.msra.mxu0 0.0
    %654 = vmatprep.subr.mxu0 0.0
    %655 = vmatpush1.msra.mxu0 0.0
    %656 = vmatprep.subr.mxu0 0.0
    %657 = vmatpush1.msra.mxu0 0.0
    %658 = vmatprep.subr.mxu0 0.0
    %659 = vmatpush1.msra.mxu0 0.0
    %660 = vmatprep.subr.mxu0 0.0
    %661 = vmatpush1.msra.mxu0 0.0
    %662 = vmatprep.subr.mxu0 0.0
    %663 = vmatpush1.msra.mxu0 %v626
    %664 = vmatprep.subr.mxu0 0.0
    %665 = vmatpush1.msra.mxu0 %v625
    %666 = vmatprep.subr.mxu0 0.0
    %667 = vmatpush2.msra.mxu0 0.0
    %668 = vmatprep.subr.mxu0 0.0
    %669 = vmatpush2.msra.mxu0 0.0
    %670 = vmatprep.subr.mxu0 0.0
    %671 = vmatpush2.msra.mxu0 0.0
    %672 = vmatprep.subr.mxu0 0.0
    %673 = vmatpush2.msra.mxu0 0.0
    %674 = vmatprep.subr.mxu0 0.0
    %675 = vmatpush2.msra.mxu0 0.0
    %676 = vmatprep.subr.mxu0 0.0
    %677 = vmatpush2.msra.mxu0 0.0
    %678 = vmatprep.subr.mxu0 0.0
    %679 = vmatpush2.msra.mxu0 0.0
    %680 = vmatprep.subr.mxu0 0.0
    %681 = vmatpush2.msra.mxu0 0.0
    %682 = vmatprep.subr.mxu0 0.0
    %683 = vmatpush2.msra.mxu0 0.0
    %684 = vmatprep.subr.mxu0 0.0
    %685 = vmatpush2.msra.mxu0 0.0
    %686 = vmatprep.subr.mxu0 0.0
    %687 = vmatpush2.msra.mxu0 0.0
    %688 = vmatprep.subr.mxu0 0.0
    %689 = vmatpush2.msra.mxu0 0.0
    %690 = vmatprep.subr.mxu0 0.0
    %691 = vmatpush2.msra.mxu0 0.0
    %692 = vmatprep.subr.mxu0 0.0
    %693 = vmatpush2.msra.mxu0 0.0
    %694 = vmatprep.subr.mxu0 0.0
    %695 = vmatpush2.msra.mxu0 0.0
    %696 = vmatprep.subr.mxu0 0.0
    %697 = vmatpush2.msra.mxu0 0.0
    %698 = vmatprep.mubr.f32.mxu0 0.0
    %699 = vmatmul.mubr.f32.gmra.mxu0 %v629
    %v700 = vpop.f32.mrf.mxu0
    %v701 = vadd.f32 0.0, %v700
    %v702 = vpop.f32.mrf.mxu0
    %703 = vmatprep.mubr.f32.mxu0 0.0
    %704 = vmatmul.mubr.f32.gmra.mxu0 %v632
    %v705 = vpop.f32.mrf.mxu0
    %v706 = vadd.f32 0.0, %v705
    %v707 = vpop.f32.mrf.mxu0
    %708 = vdwg.mxu0
    %v709 = vrcp.pop %v701
    %v710 = vrcp.pop %v706
    %v711 = vmul.f32 %v625, %v709
    %v712 = vmul.f32 %v626, %v710
    %v713 = vsel %vm80, %v711, 0.0
    %714 = vadd.xlane.f32.xlu0 %v713
    %v715 = vpop.xlane.xlu0 %714
    %v716 = vsel %vm80, %v712, 0.0
    %717 = vadd.xlane.f32.xlu0 %v716
    %v718 = vpop.xlane.xlu0 %717
    %v719 = vrcp.pop 32.0
    %v720 = vmul.f32 %v715, %v719
    %v721 = vmul.f32 %v718, %v719
    %v722 = vsub.f32 %v711, %v720
    %v723 = vsub.f32 %v712, %v721
    %v724 = vmul.f32 %v722, %v722
    %v725 = vmul.f32 %v723, %v723
    %v726 = vsel %vm80, %v724, 0.0
    %727 = vadd.xlane.f32.xlu0 %v726
    %v728 = vpop.xlane.xlu0 %727
    %v729 = vsel %vm80, %v725, 0.0
    %730 = vadd.xlane.f32.xlu0 %v729
    %v731 = vpop.xlane.xlu0 %730
    %v732 = vmul.f32 %v728, %v719
    %v733 = vmul.f32 %v731, %v719
    %v734 = vadd.f32 %v732, 1e-05
    %v735 = vadd.f32 %v733, 1e-05
    %v736 = vrsqrt.pop %v734
    %v737 = vrsqrt.pop %v735
    %v738 = vmul.f32 %v722, %v736
    %v739 = vmul.f32 %v723, %v737
    %v740 = vlaneseq
    %v741 = vshrl.u32 %v740, 7
    %v742 = vsub.s32 0, %v741
    %v743 = vrot.slane %v38, %v742
    %v744 = vmul.f32 %v738, %v743
    %v745 = vmul.f32 %v739, %v743
    %v746 = vlaneseq
    %v747 = vshrl.u32 %v746, 7
    %v748 = vsub.s32 0, %v747
    %v749 = vrot.slane %v39, %v748
    %v750 = vadd.f32 %v744, %v749
    %v751 = vadd.f32 %v745, %v749
    %v752 = vpack.c.bf16 %v751, %v750
    %v753 = vld [vmem:[%s2] sm:$0xf]
    %v754 = vld [vmem:[%s2 + $0x4] sm:$0xf]
    %v755 = vld [vmem:[%s2 + $0x8] sm:$0xf]
    %v756 = vld [vmem:[%s2 + $0xc] sm:$0xf]
    %v757 = vlaneseq
    %v758 = vshrl.u32 %v757, 7
    %v759 = vsub.s32 0, %v758
    %v760 = vrot.slane %v40, %v759
    %v765 = vunpack.c.l.b16 %v753
    %v766 = vunpack.c.l.b16 %v754
    %v767 = vunpack.c.l.b16 %v755
    %v768 = vunpack.c.l.b16 %v756
    %v769 = vpack.c.b16 %v766, %v765
    %v770 = vpack.c.b16 %v768, %v767
    %v774 = vsel %vm80, %v752, 0
    %776 = vmatprep.subr.bf16.mxu0 0
    %777 = vmatpush1.bf16.msra.mxu0 0
    %778 = vmatprep.subr.bf16.mxu0 0
    %779 = vmatpush1.bf16.msra.mxu0 0
    %780 = vmatprep.subr.bf16.mxu0 0
    %781 = vmatpush1.bf16.msra.mxu0 0
    %782 = vmatprep.subr.bf16.mxu0 0
    %783 = vmatpush1.bf16.msra.mxu0 0
    %784 = vmatprep.subr.bf16.mxu0 0
    %785 = vmatpush1.bf16.msra.mxu0 0
    %786 = vmatprep.subr.bf16.mxu0 0
    %787 = vmatpush1.bf16.msra.mxu0 0
    %788 = vmatprep.subr.bf16.mxu0 0
    %789 = vmatpush1.bf16.msra.mxu0 %v770
    %790 = vmatprep.subr.bf16.mxu0 0
    %791 = vmatpush1.bf16.msra.mxu0 %v769
    %792 = vmatprep.subr.bf16.mxu0 0
    %793 = vmatpush2.bf16.msra.mxu0 0
    %794 = vmatprep.subr.bf16.mxu0 0
    %795 = vmatpush2.bf16.msra.mxu0 0
    %796 = vmatprep.subr.bf16.mxu0 0
    %797 = vmatpush2.bf16.msra.mxu0 0
    %798 = vmatprep.subr.bf16.mxu0 0
    %799 = vmatpush2.bf16.msra.mxu0 0
    %800 = vmatprep.subr.bf16.mxu0 0
    %801 = vmatpush2.bf16.msra.mxu0 0
    %802 = vmatprep.subr.bf16.mxu0 0
    %803 = vmatpush2.bf16.msra.mxu0 0
    %804 = vmatprep.subr.bf16.mxu0 0
    %805 = vmatpush2.bf16.msra.mxu0 0
    %806 = vmatprep.subr.bf16.mxu0 0
    %807 = vmatpush2.bf16.msra.mxu0 0
    %808 = vmatprep.mubr.bf16.mxu0 0
    %809 = vmatmul.mubr.bf16.gmra.mxu0 %v774
    %v810 = vpop.f32.mrf.mxu0
    %v811 = vadd.f32 %v760, %v810
    %v812 = vpop.f32.mrf.mxu0
    %v813 = vpop.f32.mrf.mxu0
    %v814 = vadd.f32 %v760, %v813
    %v815 = vpop.f32.mrf.mxu0
    %816 = vdwg.mxu0
    %817 = vst [vmem:[%s5] sm:$0xff] %v811
    %818 = vst [vmem:[%s5 + $0x8] sm:$0xff] %v814
    // Predicated region
    $region26: #{multihead_dilated_attention.1} parent=1 // pred_check
      _
    $region27: #{multihead_dilated_attention.1} parent=1 // pred_check_branch
      %820 = sbr.rel (0) target = $region29
    $region28: #{multihead_dilated_attention.1} parent=1 // pred_region
      _
    $region29: #{multihead_dilated_attention.1} parent=1 // pred_fallthru
      _
    // Predicated region
    $region30: #{multihead_dilated_attention.1} parent=1 // pred_check
      _
    $region31: #{multihead_dilated_attention.1} parent=1 // pred_check_branch
      %822 = sbr.rel (0) target = $region33
    $region32: #{multihead_dilated_attention.1} parent=1 // pred_region
      _
    $region33: #{multihead_dilated_attention.1} parent=1 // pred_fallthru
      _
    %823 = vsyncpa [#allocation3], 1

</llo_original>
